<compile_context>
chip_gen: v6e
topology: v6e:2x2x1
jax: 0.10.0
libtpu: 0.0.40
codegen_flags: <defaults>
</compile_context>

<pallas_src>
import numpy as np
import jax
import jax.numpy as jnp
from jax.experimental import pallas as pl
from jax.experimental.pallas import tpu as pltpu

LANE = 128       # lane-dense feature padding for the weight slab
SUBLANE = 8      # f32 sublane granularity


def _round_up(x, m):
    return ((x + m - 1) // m) * m


def init_params(key, in_dim, up_dim, depth=4, given_dims=None):
    """Deterministic parameter init mirroring DenseEmbedder.__init__ shapes.

    Conv weights are stored transposed as (C_in, C_out) relative to PyTorch's
    (C_out, C_in, 1, 1); a real checkpoint load must transpose.
    """
    if given_dims is not None:
        assert given_dims[0] == in_dim and given_dims[-1] == up_dim
        dims = np.asarray(given_dims)
    else:
        dims = np.linspace(in_dim, up_dim, depth).astype(int)

    hidden = []
    for l in range(len(dims) - 2):
        d_in, d_out = int(dims[l]), int(dims[l + 1])
        key, k1, k2, k3, k4 = jax.random.split(key, 5)
        bound = 1.0 / np.sqrt(d_in)  # PyTorch Conv2d default bound
        w = jax.random.uniform(k1, (d_in, d_out), jnp.float32, -bound, bound)
        b = jax.random.uniform(k2, (1, d_out), jnp.float32, -bound, bound)
        # ActNorm params (perturbed from identity so the affine path is exercised).
        loc = 0.1 * jax.random.normal(k3, (1, d_out), jnp.float32)
        scale = 1.0 + 0.1 * jax.random.normal(k4, (1, d_out), jnp.float32)
        hidden.append((w, b, loc, scale))

    d_in, d_out = int(dims[-2]), int(dims[-1])
    key, k1, k2 = jax.random.split(key, 3)
    bound = 1.0 / np.sqrt(d_in)
    w_f = jax.random.uniform(k1, (d_in, d_out), jnp.float32, -bound, bound)
    b_f = jax.random.uniform(k2, (1, d_out), jnp.float32, -bound, bound)
    return {"hidden": hidden, "final": (w_f, b_f)}


def fold_and_pad_params(params, pad=LANE):
    """One-time prep: fold ActNorm into conv params and pack into padded slabs.

    Returns (w_slab: (L, pad, pad) f32, b_slab: (L, 1, pad) f32, n_layers).
    Padded weight rows / bias lanes are exact zeros.
    """
    layers = []
    for (w, b, loc, scale) in params["hidden"]:
        # scale * (h @ W + b + loc)  ==  h @ (W * scale) + (b + loc) * scale
        layers.append((np.asarray(w * scale), np.asarray((b + loc) * scale)))
    w_f, b_f = params["final"]
    layers.append((np.asarray(w_f), np.asarray(b_f)))

    n_layers = len(layers)
    w_slab = np.zeros((n_layers, pad, pad), np.float32)
    b_slab = np.zeros((n_layers, 1, pad), np.float32)
    for l, (w, b) in enumerate(layers):
        d_in, d_out = w.shape
        assert d_in <= pad and d_out <= pad
        w_slab[l, :d_in, :d_out] = w
        b_slab[l, 0, :d_out] = b.reshape(-1)
    return jnp.asarray(w_slab), jnp.asarray(b_slab), n_layers


def _make_kernel(n_layers, c_in, out_dim):
    """Fused MLP: (n_layers-1) x (matmul+bias+leaky_relu) + final matmul+bias."""

    def kernel(x_ref, w_ref, b_ref, o_ref):
        # x block is (tile_n, c_in): no lane padding was materialized in HBM.
        h = x_ref[...].astype(jnp.float32)
        for l in range(n_layers):
            w = w_ref[l]
            if l == 0:
                w = w[:c_in, :]            # layer 0: K = c_in (padded rows untouched)
            h = jnp.dot(h, w, preferred_element_type=jnp.float32) + b_ref[l]
            if l != n_layers - 1:
                h = jnp.maximum(h, 0.2 * h)  # LeakyReLU(0.2)
        # Write only the real output lanes (out block last dim == up_dim).
        o_ref[...] = h[:, :out_dim].astype(o_ref.dtype)

    return kernel


def _choose_tiling(n, tile_n_max=1024):
    """Pick (tile_n, n_pad, grid) with minimal row padding (<= ~8 rows/step)."""
    n8 = _round_up(max(int(n), 1), SUBLANE)
    g = -(-n8 // tile_n_max)                 # steps needed at max tile size
    if g == 1 and n8 >= 2 * SUBLANE:
        g = 2                                # v7x: give both TensorCores a tile
    tile_n = _round_up(-(-n8 // g), SUBLANE)  # ceil split, sublane-aligned
    n_pad = g * tile_n
    return tile_n, n_pad, g


def dense_embedder_pallas(x_nchw, w_slab, b_slab, up_dim, tile_n_max=1024):
    """Fused DenseEmbedder forward.  x_nchw: (N, in_dim, 1, 1) -> (N, up_dim)."""
    N, C, H, W = x_nchw.shape
    assert H == 1 and W == 1, "DenseEmbedder expects vector-like (N, C, 1, 1) input"
    L, pad, _ = w_slab.shape
    assert C <= pad and up_dim <= pad

    # (N, C) input: real bytes only, no 128-lane HBM padding.
    x = x_nchw.reshape(N, C).astype(jnp.float32)

    tile_n, n_pad, grid_n = _choose_tiling(N, tile_n_max)
    if n_pad != N:
        # At most ~8*grid_n dummy rows; their outputs are sliced off below.
        x = jnp.pad(x, ((0, n_pad - N), (0, 0)))

    kernel = _make_kernel(L, C, up_dim)
    cost = pl.CostEstimate(
        flops=int(2 * n_pad * pad * pad * L),
        transcendentals=0,
        bytes_accessed=int(4 * (n_pad * C + n_pad * up_dim + w_slab.size + b_slab.size)),
    )

    out = pl.pallas_call(
        kernel,
        out_shape=jax.ShapeDtypeStruct((n_pad, up_dim), jnp.float32),
        grid=(grid_n,),
        in_specs=[
            # x: one batch tile per step; last dim == full array dim (C).
            pl.BlockSpec((tile_n, C), lambda i: (i, 0)),
            # Weights / biases: same block every step -> stay VMEM-resident.
            pl.BlockSpec((L, pad, pad), lambda i: (0, 0, 0)),
            pl.BlockSpec((L, 1, pad), lambda i: (0, 0, 0)),
        ],
        # Output: only up_dim lanes (full last dim) -> ~4x less writeback.
        out_specs=pl.BlockSpec((tile_n, up_dim), lambda i: (i, 0)),
        compiler_params=pltpu.CompilerParams(
            dimension_semantics=("parallel",),   # batch tiles split across TCs on v7x
            vmem_limit_bytes=32 * 1024 * 1024,
        ),
        cost_estimate=cost,
    )(x, w_slab, b_slab)

    return out[:N] if n_pad != N else out


def dense_embedder_reference(x_nchw, params):
    """Pure-JAX reference using the ORIGINAL (un-folded) parameters."""
    N, C, _, _ = x_nchw.shape
    h = x_nchw.reshape(N, C).astype(jnp.float32)
    for (w, b, loc, scale) in params["hidden"]:
        h = h @ w + b
        h = scale * (h + loc)
        h = jnp.where(h >= 0.0, h, 0.2 * h)
    w, b = params["final"]
    return h @ w + b


if __name__ == "__main__":
    in_dim, up_dim, depth = 4, 32, 4      # dims = linspace(4, 32, 4) -> [4, 13, 22, 32]
    batch = 2

    key = jax.random.PRNGKey(0)
    key, kx, kp = jax.random.split(key, 3)
    x = jax.random.normal(kx, (batch, in_dim, 1, 1), jnp.float32)  # NCHW, H=W=1
    params = init_params(kp, in_dim, up_dim, depth)

    # One-time param prep: fold ActNorm + pack/pad into slabs.
    w_slab, b_slab, _ = fold_and_pad_params(params)

    out = dense_embedder_pallas(x, w_slab, b_slab, up_dim)
    out = jax.block_until_ready(out)

    ref = dense_embedder_reference(x, params)
    assert out.shape == (batch, up_dim), out.shape
    np.testing.assert_allclose(np.asarray(out), np.asarray(ref), rtol=1e-4, atol=1e-5)

    # TODO(synk): ActNorm's data-dependent initialization (train-time first-call
    # statistics) is not reproduced; only the inference-time affine forward is.
    print("KERNEL_OK")
</pallas_src>

<mosaic_0001>
module attributes {stable_mosaic.version = 11 : i64} {
  func.func @kernel(%arg0: i32, %arg1: memref<8x4xf32, #tpu.memory_space<vmem>>, %arg2: memref<3x128x128xf32, #tpu.memory_space<vmem>>, %arg3: memref<3x1x128xf32, #tpu.memory_space<vmem>>, %arg4: memref<8x32xf32, #tpu.memory_space<vmem>>) attributes {dimension_semantics = [#tpu.dimension_semantics<parallel>], iteration_bounds = array<i64: 1>, scalar_prefetch = 0 : i64, scratch_operands = 0 : i64, tpu.core_type = #tpu.core_type<tc>, window_params = [{transform_indices = @transform_0, window_bounds = array<i64: 8, 4>}, {pipeline_mode = #tpu.pipeline_mode<synchronous>, transform_indices = @transform_1, window_bounds = array<i64: 3, 128, 128>}, {pipeline_mode = #tpu.pipeline_mode<synchronous>, transform_indices = @transform_2, window_bounds = array<i64: 3, 1, 128>}, {transform_indices = @transform_3, window_bounds = array<i64: 8, 32>}]} {
    %c0 = arith.constant 0 : index
    %c0_0 = arith.constant 0 : index
    %0 = vector.load %arg1[%c0, %c0_0] : memref<8x4xf32, #tpu.memory_space<vmem>>, vector<8x4xf32>
    %c0_1 = arith.constant 0 : index
    %c0_2 = arith.constant 0 : index
    %c0_3 = arith.constant 0 : index
    %1 = vector.load %arg2[%c0_1, %c0_2, %c0_3] : memref<3x128x128xf32, #tpu.memory_space<vmem>>, vector<1x128x128xf32>
    %2 = vector.shape_cast %1 : vector<1x128x128xf32> to vector<128x128xf32>
    %3 = vector.extract_strided_slice %2 {offsets = [0, 0], sizes = [4, 128], strides = [1, 1]} : vector<128x128xf32> to vector<4x128xf32>
    %cst = arith.constant dense<0.000000e+00> : vector<8x128xf32>
    %4 = tpu.matmul %0, %3, %cst {dimension_numbers = #tpu.dot_dimension_numbers<[1], [0], [0], [1], [0, 0, 1, 1], [], []>} : vector<8x4xf32>, vector<4x128xf32>, vector<8x128xf32> -> vector<8x128xf32>
    %c0_4 = arith.constant 0 : index
    %c0_5 = arith.constant 0 : index
    %c0_6 = arith.constant 0 : index
    %5 = vector.load %arg3[%c0_4, %c0_5, %c0_6] : memref<3x1x128xf32, #tpu.memory_space<vmem>>, vector<1x1x128xf32>
    %6 = vector.shape_cast %5 : vector<1x1x128xf32> to vector<1x128xf32>
    %7 = vector.broadcast %6 : vector<1x128xf32> to vector<8x128xf32>
    %8 = arith.addf %4, %7 : vector<8x128xf32>
    %cst_7 = arith.constant 2.000000e-01 : f32
    %9 = vector.broadcast %cst_7 : f32 to vector<8x128xf32>
    %10 = arith.mulf %9, %8 : vector<8x128xf32>
    %11 = arith.maximumf %8, %10 : vector<8x128xf32>
    %c1 = arith.constant 1 : index
    %c0_8 = arith.constant 0 : index
    %c0_9 = arith.constant 0 : index
    %12 = vector.load %arg2[%c1, %c0_8, %c0_9] : memref<3x128x128xf32, #tpu.memory_space<vmem>>, vector<1x128x128xf32>
    %13 = vector.shape_cast %12 : vector<1x128x128xf32> to vector<128x128xf32>
    %cst_10 = arith.constant dense<0.000000e+00> : vector<8x128xf32>
    %14 = tpu.matmul %11, %13, %cst_10 {dimension_numbers = #tpu.dot_dimension_numbers<[1], [0], [0], [1], [0, 0, 1, 1], [], []>} : vector<8x128xf32>, vector<128x128xf32>, vector<8x128xf32> -> vector<8x128xf32>
    %c1_11 = arith.constant 1 : index
    %c0_12 = arith.constant 0 : index
    %c0_13 = arith.constant 0 : index
    %15 = vector.load %arg3[%c1_11, %c0_12, %c0_13] : memref<3x1x128xf32, #tpu.memory_space<vmem>>, vector<1x1x128xf32>
    %16 = vector.shape_cast %15 : vector<1x1x128xf32> to vector<1x128xf32>
    %17 = vector.broadcast %16 : vector<1x128xf32> to vector<8x128xf32>
    %18 = arith.addf %14, %17 : vector<8x128xf32>
    %cst_14 = arith.constant 2.000000e-01 : f32
    %19 = vector.broadcast %cst_14 : f32 to vector<8x128xf32>
    %20 = arith.mulf %19, %18 : vector<8x128xf32>
    %21 = arith.maximumf %18, %20 : vector<8x128xf32>
    %c2 = arith.constant 2 : index
    %c0_15 = arith.constant 0 : index
    %c0_16 = arith.constant 0 : index
    %22 = vector.load %arg2[%c2, %c0_15, %c0_16] : memref<3x128x128xf32, #tpu.memory_space<vmem>>, vector<1x128x128xf32>
    %23 = vector.shape_cast %22 : vector<1x128x128xf32> to vector<128x128xf32>
    %cst_17 = arith.constant dense<0.000000e+00> : vector<8x128xf32>
    %24 = tpu.matmul %21, %23, %cst_17 {dimension_numbers = #tpu.dot_dimension_numbers<[1], [0], [0], [1], [0, 0, 1, 1], [], []>} : vector<8x128xf32>, vector<128x128xf32>, vector<8x128xf32> -> vector<8x128xf32>
    %c2_18 = arith.constant 2 : index
    %c0_19 = arith.constant 0 : index
    %c0_20 = arith.constant 0 : index
    %25 = vector.load %arg3[%c2_18, %c0_19, %c0_20] : memref<3x1x128xf32, #tpu.memory_space<vmem>>, vector<1x1x128xf32>
    %26 = vector.shape_cast %25 : vector<1x1x128xf32> to vector<1x128xf32>
    %27 = vector.broadcast %26 : vector<1x128xf32> to vector<8x128xf32>
    %28 = arith.addf %24, %27 : vector<8x128xf32>
    %29 = vector.extract_strided_slice %28 {offsets = [0, 0], sizes = [8, 32], strides = [1, 1]} : vector<8x128xf32> to vector<8x32xf32>
    %c0_21 = arith.constant 0 : index
    %c0_22 = arith.constant 0 : index
    %30 = vector.load %arg4[%c0_21, %c0_22] : memref<8x32xf32, #tpu.memory_space<vmem>>, vector<8x32xf32>
    tpu.vector_store %arg4[%c0_21, %c0_22], %29 {strides = array<i32>} : memref<8x32xf32, #tpu.memory_space<vmem>>, vector<8x32xf32>,
    return
  }
  func.func @transform_0(%arg0: i32) -> (i32, i32) {
    %c0_i32 = arith.constant 0 : i32
    %c0_i32_0 = arith.constant 0 : i32
    return %arg0, %c0_i32 : i32, i32
  }
  func.func @transform_1(%arg0: i32) -> (i32, i32, i32) {
    %c0_i32 = arith.constant 0 : i32
    %c0_i32_0 = arith.constant 0 : i32
    %c0_i32_1 = arith.constant 0 : i32
    %c0_i32_2 = arith.constant 0 : i32
    return %c0_i32, %c0_i32_0, %c0_i32_1 : i32, i32, i32
  }
  func.func @transform_2(%arg0: i32) -> (i32, i32, i32) {
    %c0_i32 = arith.constant 0 : i32
    %c0_i32_0 = arith.constant 0 : i32
    %c0_i32_1 = arith.constant 0 : i32
    %c0_i32_2 = arith.constant 0 : i32
    return %c0_i32, %c0_i32_0, %c0_i32_1 : i32, i32, i32
  }
  func.func @transform_3(%arg0: i32) -> (i32, i32) {
    %c0_i32 = arith.constant 0 : i32
    %c0_i32_0 = arith.constant 0 : i32
    return %arg0, %c0_i32 : i32, i32
  }
}

</mosaic_0001>

<llo_original>
// kernel: tpu_custom_call.1
$region0: #{tpu_custom_call.1}
  #allocation0 [shape = 'u32[]', space=smem, size = 0x4, offset = 0x4, fixed_abs, tag = 'smem constant byte address 0x4 - core index']
  #allocation1 [shape = 'u32[144,128]{1,0:T(1,128)}', space=vmem, size = 0x12000, scoped, tag = 'internal scratch']
  %s0 = inlined_call_operand.vmem [shape: f32[8,4], index: 0, kind: input, shape index: {}]
  %s1 = inlined_call_operand.hbm [shape: f32[3,128,128], index: 1, kind: input, shape index: {}]
  %s2 = inlined_call_operand.vmem [shape: f32[3,1,128], index: 2, kind: input, shape index: {}]
  %s3 = inlined_call_operand.hbm [shape: f32[8,32], index: 3, kind: output, shape index: {}]
  %s4 = sld [smem:[#allocation0]]
  $region26: #{tpu_custom_call.1} parent=0
    _
  %s6 = ssub.s32 1, %s4
  %s7 = scalar_select 0, %s6, %s4
  $region1: #{tpu_custom_call.1} parent=0
    #allocation2 [shape = 'u8[196608]{0}', space=vmem, size = 0x30000, scoped, tag = 'input window, operand 1, single buffered']
    #allocation3 [shape = 's32[1]{0}', space=sflag, size = 0x4, scoped, tag = 'scoped memory for tpu_custom_call.1']
    #allocation4 [shape = 's32[1]{0}', space=sflag, size = 0x4, scoped, tag = 'scoped memory for tpu_custom_call.1']
    #allocation5 [shape = 'u8[4096]{0}', space=vmem, size = 0x1000, scoped, tag = 'output window, operand 0, single buffered']
    %8 = vsyncpa [#allocation3], 0
    %9 = vsyncpa [#allocation4], 0
    // Predicated region
    $region2: #{tpu_custom_call.1} parent=1 // pred_check
      _
    $region3: #{tpu_custom_call.1} parent=1 // pred_check_branch
      %11 = sbr.rel (0) target = $region5
    $region4: #{tpu_custom_call.1} parent=1 // pred_region
      _
    $region5: #{tpu_custom_call.1} parent=1 // pred_fallthru
      _
    // Predicated region
    $region6: #{tpu_custom_call.1} parent=1 // pred_check
      _
    $region7: #{tpu_custom_call.1} parent=1 // pred_check_branch
      %13 = sbr.rel (0) target = $region9
    $region8: #{tpu_custom_call.1} parent=1 // pred_region
      %s15 = ssub.s32 6144, 6144
      %16 = vsyncadd [#allocation3], %s15
      %s17 = sshll.u32 [#allocation2], 4
      %s18 = int_to_ptr.vmem [resolvable:$true] %s17
      %23 = dma.hbm_to_vmem [thread:$0]  %s1, 6144, %s18, [#allocation3], 128, 128, 8
    $region9: #{tpu_custom_call.1} parent=1 // pred_fallthru
      _
    // Predicated region
    $region10: #{tpu_custom_call.1} parent=1 // pred_check
      _
    $region11: #{tpu_custom_call.1} parent=1 // pred_check_branch
      %25 = sbr.rel (0) target = $region13
    $region12: #{tpu_custom_call.1} parent=1 // pred_region
      _
    $region13: #{tpu_custom_call.1} parent=1 // pred_fallthru
      _
    // Predicated region
    $region14: #{tpu_custom_call.1} parent=1 // pred_check
      _
    $region15: #{tpu_custom_call.1} parent=1 // pred_check_branch
      %27 = sbr.rel (0) target = $region17
    $region16: #{tpu_custom_call.1} parent=1 // pred_region
      %28 = dma.done [#allocation3], 6144
    $region17: #{tpu_custom_call.1} parent=1 // pred_fallthru
      _
    %v29 = vld [vmem:[%s0] sm:$0xff]
    %v30 = vld [vmem:[#allocation2] sm:$0xff]
    %v31 = vld [vmem:[%s2] sm:$0x1]
    %v33 = vlaneseq
    %v34 = vshrl.u32 %v33, 7
    %v35 = vsub.s32 0, %v34
    %v36 = vrot.slane %v31, %v35
    %vm38 = vcmask 31744
    %v40 = vsel %vm38, %v29, 0
    %vm42 = vcmask 1043456
    %v44 = vsel %vm42, %v30, 0
    %46 = vmatprep.subr.mxu0 0.0
    %47 = vmatpush1.msra.mxu0 0.0
    %48 = vmatprep.subr.mxu0 0.0
    %49 = vmatpush1.msra.mxu0 0.0
    %50 = vmatprep.subr.mxu0 0.0
    %51 = vmatpush1.msra.mxu0 0.0
    %52 = vmatprep.subr.mxu0 0.0
    %53 = vmatpush1.msra.mxu0 0.0
    %54 = vmatprep.subr.mxu0 0.0
    %55 = vmatpush1.msra.mxu0 0.0
    %56 = vmatprep.subr.mxu0 0.0
    %57 = vmatpush1.msra.mxu0 0.0
    %58 = vmatprep.subr.mxu0 0.0
    %59 = vmatpush1.msra.mxu0 0.0
    %60 = vmatprep.subr.mxu0 0.0
    %61 = vmatpush1.msra.mxu0 0.0
    %62 = vmatprep.subr.mxu0 0.0
    %63 = vmatpush1.msra.mxu0 0.0
    %64 = vmatprep.subr.mxu0 0.0
    %65 = vmatpush1.msra.mxu0 0.0
    %66 = vmatprep.subr.mxu0 0.0
    %67 = vmatpush1.msra.mxu0 0.0
    %68 = vmatprep.subr.mxu0 0.0
    %69 = vmatpush1.msra.mxu0 0.0
    %70 = vmatprep.subr.mxu0 0.0
    %71 = vmatpush1.msra.mxu0 0.0
    %72 = vmatprep.subr.mxu0 0.0
    %73 = vmatpush1.msra.mxu0 0.0
    %74 = vmatprep.subr.mxu0 0.0
    %75 = vmatpush1.msra.mxu0 0.0
    %76 = vmatprep.subr.mxu0 0.0
    %77 = vmatpush1.msra.mxu0 %v44
    %78 = vmatprep.subr.mxu0 0.0
    %79 = vmatpush2.msra.mxu0 0.0
    %80 = vmatprep.subr.mxu0 0.0
    %81 = vmatpush2.msra.mxu0 0.0
    %82 = vmatprep.subr.mxu0 0.0
    %83 = vmatpush2.msra.mxu0 0.0
    %84 = vmatprep.subr.mxu0 0.0
    %85 = vmatpush2.msra.mxu0 0.0
    %86 = vmatprep.subr.mxu0 0.0
    %87 = vmatpush2.msra.mxu0 0.0
    %88 = vmatprep.subr.mxu0 0.0
    %89 = vmatpush2.msra.mxu0 0.0
    %90 = vmatprep.subr.mxu0 0.0
    %91 = vmatpush2.msra.mxu0 0.0
    %92 = vmatprep.subr.mxu0 0.0
    %93 = vmatpush2.msra.mxu0 0.0
    %94 = vmatprep.subr.mxu0 0.0
    %95 = vmatpush2.msra.mxu0 0.0
    %96 = vmatprep.subr.mxu0 0.0
    %97 = vmatpush2.msra.mxu0 0.0
    %98 = vmatprep.subr.mxu0 0.0
    %99 = vmatpush2.msra.mxu0 0.0
    %100 = vmatprep.subr.mxu0 0.0
    %101 = vmatpush2.msra.mxu0 0.0
    %102 = vmatprep.subr.mxu0 0.0
    %103 = vmatpush2.msra.mxu0 0.0
    %104 = vmatprep.subr.mxu0 0.0
    %105 = vmatpush2.msra.mxu0 0.0
    %106 = vmatprep.subr.mxu0 0.0
    %107 = vmatpush2.msra.mxu0 0.0
    %108 = vmatprep.subr.mxu0 0.0
    %109 = vmatpush2.msra.mxu0 0.0
    %110 = vmatprep.mubr.f32.mxu0 0.0
    %111 = vmatmul.mubr.f32.gmra.mxu0 %v40
    %v112 = vpop.f32.mrf.mxu0
    %v113 = vadd.f32 %v36, %v112
    %v114 = vpop.f32.mrf.mxu0
    %115 = vdwg.mxu0
    %v116 = vmul.f32 %v113, 0.2
    %v117 = vmax.f32 %v113, %v116
    %s118 = scalar_lea.vmem [#allocation2], 128
    %v119 = vld [vmem:[%s118] sm:$0xff]
    %v120 = vld [vmem:[%s118 + $0x8] sm:$0xff]
    %v121 = vld [vmem:[%s118 + $0x10] sm:$0xff]
    %v122 = vld [vmem:[%s118 + $0x18] sm:$0xff]
    %v123 = vld [vmem:[%s118 + $0x20] sm:$0xff]
    %v124 = vld [vmem:[%s118 + $0x28] sm:$0xff]
    %v125 = vld [vmem:[%s118 + $0x30] sm:$0xff]
    %v126 = vld [vmem:[%s118 + $0x38] sm:$0xff]
    %v127 = vld [vmem:[%s118 + $0x40] sm:$0xff]
    %v128 = vld [vmem:[%s118 + $0x48] sm:$0xff]
    %v129 = vld [vmem:[%s118 + $0x50] sm:$0xff]
    %v130 = vld [vmem:[%s118 + $0x58] sm:$0xff]
    %v131 = vld [vmem:[%s118 + $0x60] sm:$0xff]
    %v132 = vld [vmem:[%s118 + $0x68] sm:$0xff]
    %v133 = vld [vmem:[%s118 + $0x70] sm:$0xff]
    %v134 = vld [vmem:[%s118 + $0x78] sm:$0xff]
    %s135 = scalar_lea.vmem %s2, 1
    %v136 = vld [vmem:[%s135] sm:$0x1]
    %v138 = vlaneseq
    %v139 = vshrl.u32 %v138, 7
    %v140 = vsub.s32 0, %v139
    %v141 = vrot.slane %v136, %v140
    %143 = vmatprep.subr.mxu0 0.0
    %144 = vmatpush1.msra.mxu0 %v134
    %145 = vmatprep.subr.mxu0 0.0
    %146 = vmatpush1.msra.mxu0 %v133
    %147 = vmatprep.subr.mxu0 0.0
    %148 = vmatpush1.msra.mxu0 %v132
    %149 = vmatprep.subr.mxu0 0.0
    %150 = vmatpush1.msra.mxu0 %v131
    %151 = vmatprep.subr.mxu0 0.0
    %152 = vmatpush1.msra.mxu0 %v130
    %153 = vmatprep.subr.mxu0 0.0
    %154 = vmatpush1.msra.mxu0 %v129
    %155 = vmatprep.subr.mxu0 0.0
    %156 = vmatpush1.msra.mxu0 %v128
    %157 = vmatprep.subr.mxu0 0.0
    %158 = vmatpush1.msra.mxu0 %v127
    %159 = vmatprep.subr.mxu0 0.0
    %160 = vmatpush1.msra.mxu0 %v126
    %161 = vmatprep.subr.mxu0 0.0
    %162 = vmatpush1.msra.mxu0 %v125
    %163 = vmatprep.subr.mxu0 0.0
    %164 = vmatpush1.msra.mxu0 %v124
    %165 = vmatprep.subr.mxu0 0.0
    %166 = vmatpush1.msra.mxu0 %v123
    %167 = vmatprep.subr.mxu0 0.0
    %168 = vmatpush1.msra.mxu0 %v122
    %169 = vmatprep.subr.mxu0 0.0
    %170 = vmatpush1.msra.mxu0 %v121
    %171 = vmatprep.subr.mxu0 0.0
    %172 = vmatpush1.msra.mxu0 %v120
    %173 = vmatprep.subr.mxu0 0.0
    %174 = vmatpush1.msra.mxu0 %v119
    %175 = vmatprep.subr.mxu0 0.0
    %176 = vmatpush2.msra.mxu0 0.0
    %177 = vmatprep.subr.mxu0 0.0
    %178 = vmatpush2.msra.mxu0 0.0
    %179 = vmatprep.subr.mxu0 0.0
    %180 = vmatpush2.msra.mxu0 0.0
    %181 = vmatprep.subr.mxu0 0.0
    %182 = vmatpush2.msra.mxu0 0.0
    %183 = vmatprep.subr.mxu0 0.0
    %184 = vmatpush2.msra.mxu0 0.0
    %185 = vmatprep.subr.mxu0 0.0
    %186 = vmatpush2.msra.mxu0 0.0
    %187 = vmatprep.subr.mxu0 0.0
    %188 = vmatpush2.msra.mxu0 0.0
    %189 = vmatprep.subr.mxu0 0.0
    %190 = vmatpush2.msra.mxu0 0.0
    %191 = vmatprep.subr.mxu0 0.0
    %192 = vmatpush2.msra.mxu0 0.0
    %193 = vmatprep.subr.mxu0 0.0
    %194 = vmatpush2.msra.mxu0 0.0
    %195 = vmatprep.subr.mxu0 0.0
    %196 = vmatpush2.msra.mxu0 0.0
    %197 = vmatprep.subr.mxu0 0.0
    %198 = vmatpush2.msra.mxu0 0.0
    %199 = vmatprep.subr.mxu0 0.0
    %200 = vmatpush2.msra.mxu0 0.0
    %201 = vmatprep.subr.mxu0 0.0
    %202 = vmatpush2.msra.mxu0 0.0
    %203 = vmatprep.subr.mxu0 0.0
    %204 = vmatpush2.msra.mxu0 0.0
    %205 = vmatprep.subr.mxu0 0.0
    %206 = vmatpush2.msra.mxu0 0.0
    %207 = vmatprep.mubr.f32.mxu0 0.0
    %208 = vmatmul.mubr.f32.gmra.mxu0 %v117
    %v209 = vpop.f32.mrf.mxu0
    %v210 = vadd.f32 %v141, %v209
    %v211 = vpop.f32.mrf.mxu0
    %212 = vdwg.mxu0
    %v213 = vmul.f32 %v210, 0.2
    %v214 = vmax.f32 %v210, %v213
    %s215 = scalar_lea.vmem [#allocation2], 256
    %v216 = vld [vmem:[%s215] sm:$0xff]
    %v217 = vld [vmem:[%s215 + $0x8] sm:$0xff]
    %v218 = vld [vmem:[%s215 + $0x10] sm:$0xff]
    %v219 = vld [vmem:[%s215 + $0x18] sm:$0xff]
    %v220 = vld [vmem:[%s215 + $0x20] sm:$0xff]
    %v221 = vld [vmem:[%s215 + $0x28] sm:$0xff]
    %v222 = vld [vmem:[%s215 + $0x30] sm:$0xff]
    %v223 = vld [vmem:[%s215 + $0x38] sm:$0xff]
    %v224 = vld [vmem:[%s215 + $0x40] sm:$0xff]
    %v225 = vld [vmem:[%s215 + $0x48] sm:$0xff]
    %v226 = vld [vmem:[%s215 + $0x50] sm:$0xff]
    %v227 = vld [vmem:[%s215 + $0x58] sm:$0xff]
    %v228 = vld [vmem:[%s215 + $0x60] sm:$0xff]
    %v229 = vld [vmem:[%s215 + $0x68] sm:$0xff]
    %v230 = vld [vmem:[%s215 + $0x70] sm:$0xff]
    %v231 = vld [vmem:[%s215 + $0x78] sm:$0xff]
    %s232 = scalar_lea.vmem %s2, 2
    %v233 = vld [vmem:[%s232] sm:$0x1]
    %v235 = vlaneseq
    %v236 = vshrl.u32 %v235, 7
    %v237 = vsub.s32 0, %v236
    %v238 = vrot.slane %v233, %v237
    %240 = vmatprep.subr.mxu0 0.0
    %241 = vmatpush1.msra.mxu0 %v231
    %242 = vmatprep.subr.mxu0 0.0
    %243 = vmatpush1.msra.mxu0 %v230
    %244 = vmatprep.subr.mxu0 0.0
    %245 = vmatpush1.msra.mxu0 %v229
    %246 = vmatprep.subr.mxu0 0.0
    %247 = vmatpush1.msra.mxu0 %v228
    %248 = vmatprep.subr.mxu0 0.0
    %249 = vmatpush1.msra.mxu0 %v227
    %250 = vmatprep.subr.mxu0 0.0
    %251 = vmatpush1.msra.mxu0 %v226
    %252 = vmatprep.subr.mxu0 0.0
    %253 = vmatpush1.msra.mxu0 %v225
    %254 = vmatprep.subr.mxu0 0.0
    %255 = vmatpush1.msra.mxu0 %v224
    %256 = vmatprep.subr.mxu0 0.0
    %257 = vmatpush1.msra.mxu0 %v223
    %258 = vmatprep.subr.mxu0 0.0
    %259 = vmatpush1.msra.mxu0 %v222
    %260 = vmatprep.subr.mxu0 0.0
    %261 = vmatpush1.msra.mxu0 %v221
    %262 = vmatprep.subr.mxu0 0.0
    %263 = vmatpush1.msra.mxu0 %v220
    %264 = vmatprep.subr.mxu0 0.0
    %265 = vmatpush1.msra.mxu0 %v219
    %266 = vmatprep.subr.mxu0 0.0
    %267 = vmatpush1.msra.mxu0 %v218
    %268 = vmatprep.subr.mxu0 0.0
    %269 = vmatpush1.msra.mxu0 %v217
    %270 = vmatprep.subr.mxu0 0.0
    %271 = vmatpush1.msra.mxu0 %v216
    %272 = vmatprep.subr.mxu0 0.0
    %273 = vmatpush2.msra.mxu0 0.0
    %274 = vmatprep.subr.mxu0 0.0
    %275 = vmatpush2.msra.mxu0 0.0
    %276 = vmatprep.subr.mxu0 0.0
    %277 = vmatpush2.msra.mxu0 0.0
    %278 = vmatprep.subr.mxu0 0.0
    %279 = vmatpush2.msra.mxu0 0.0
    %280 = vmatprep.subr.mxu0 0.0
    %281 = vmatpush2.msra.mxu0 0.0
    %282 = vmatprep.subr.mxu0 0.0
    %283 = vmatpush2.msra.mxu0 0.0
    %284 = vmatprep.subr.mxu0 0.0
    %285 = vmatpush2.msra.mxu0 0.0
    %286 = vmatprep.subr.mxu0 0.0
    %287 = vmatpush2.msra.mxu0 0.0
    %288 = vmatprep.subr.mxu0 0.0
    %289 = vmatpush2.msra.mxu0 0.0
    %290 = vmatprep.subr.mxu0 0.0
    %291 = vmatpush2.msra.mxu0 0.0
    %292 = vmatprep.subr.mxu0 0.0
    %293 = vmatpush2.msra.mxu0 0.0
    %294 = vmatprep.subr.mxu0 0.0
    %295 = vmatpush2.msra.mxu0 0.0
    %296 = vmatprep.subr.mxu0 0.0
    %297 = vmatpush2.msra.mxu0 0.0
    %298 = vmatprep.subr.mxu0 0.0
    %299 = vmatpush2.msra.mxu0 0.0
    %300 = vmatprep.subr.mxu0 0.0
    %301 = vmatpush2.msra.mxu0 0.0
    %302 = vmatprep.subr.mxu0 0.0
    %303 = vmatpush2.msra.mxu0 0.0
    %304 = vmatprep.mubr.f32.mxu0 0.0
    %305 = vmatmul.mubr.f32.gmra.mxu0 %v214
    %v306 = vpop.f32.mrf.mxu0
    %v307 = vadd.f32 %v238, %v306
    %v308 = vpop.f32.mrf.mxu0
    %309 = vdwg.mxu0
    %vm310 = vcmask 261120
    %311 = vst.msk [vmem:[#allocation5] sm:$0xff] %vm310, %v307
    // Predicated region
    $region18: #{tpu_custom_call.1} parent=1 // pred_check
      _
    $region19: #{tpu_custom_call.1} parent=1 // pred_check_branch
      %313 = sbr.rel (0) target = $region21
    $region20: #{tpu_custom_call.1} parent=1 // pred_region
      %s315 = ssub.s32 128, 128
      %316 = vsyncadd [#allocation4], %s315
      %s318 = sshll.u32 [#allocation5], 4
      %s319 = int_to_ptr.vmem [resolvable:$true] %s318
      %321 = dma.vmem_to_hbm [thread:$0]  %s319, 128, %s3, [#allocation4]
    $region21: #{tpu_custom_call.1} parent=1 // pred_fallthru
      _
    // Predicated region
    $region22: #{tpu_custom_call.1} parent=1 // pred_check
      _
    $region23: #{tpu_custom_call.1} parent=1 // pred_check_branch
      %323 = sbr.rel (0) target = $region25
    $region24: #{tpu_custom_call.1} parent=1 // pred_region
      %324 = dma.done [#allocation4], 128
    $region25: #{tpu_custom_call.1} parent=1 // pred_fallthru
      _
    %325 = vsyncpa [#allocation3], 1
    %326 = vsyncpa [#allocation4], 1

</llo_original>
